<compile_context>
chip_gen: v6e
topology: v6e:2x2x1
jax: 0.10.0
libtpu: 0.0.40
codegen_flags: <defaults>
</compile_context>

<pallas_src>
import jax
import jax.numpy as jnp
from jax.experimental import pallas as pl
from jax.experimental.pallas import tpu as pltpu


def _mlp_kernel(x_ref, w1_ref, b1_ref, w2h_ref, b2_ref, w3_ref, b3_ref, o_ref):
    # x_ref : (tm, 2*Kp) bf16 -- lanes [0:Kp]   = folded rows "lo" (8 logical rows)
    #                            lanes [Kp:2Kp] = folded rows "hi" (next 8 rows)
    # w1    : (Kp, Hp)      block-diag(P copies of W1), bf16
    # w2h   : (Hp/2, Hp/2)  block-diag(P/2 copies of W2), bf16 -- both diagonal halves
    #                       of the full block-diag W2 are identical, so one array serves both
    # w3    : (Hp, Op)      block-diag(P copies of W3), bf16
    # b*    : (1, Hp)/(1, Op) f32 tiled biases
    # o_ref : (tm, 2*Op)    output dtype (f32)
    Kp = w1_ref.shape[0]
    Hp = w1_ref.shape[1]
    Op = w3_ref.shape[1]
    Hh = Hp // 2

    w1 = w1_ref[...]
    w2h = w2h_ref[...]
    w3 = w3_ref[...]
    b1 = b1_ref[...]
    b2 = b2_ref[...]
    b3 = b3_ref[...]
    cdt = w1.dtype

    def mlp(xh):
        h1 = jnp.dot(xh, w1, preferred_element_type=jnp.float32) + b1
        h1 = jnp.maximum(h1, 0.0).astype(cdt)
        # Layer 2: only the two diagonal (Hp/2 x Hp/2) tiles of the block-diagonal
        # weight are nonzero -- skip the all-zero off-diagonal MXU tiles.
        h2 = jnp.concatenate(
            [jnp.dot(h1[:, :Hh], w2h, preferred_element_type=jnp.float32),
             jnp.dot(h1[:, Hh:], w2h, preferred_element_type=jnp.float32)],
            axis=-1) + b2
        h2 = jnp.maximum(h2, 0.0).astype(cdt)
        return jnp.dot(h2, w3, preferred_element_type=jnp.float32) + b3

    # Store each half immediately to keep intermediate liveness (and VMEM) low.
    o_ref[:, :Op] = mlp(x_ref[:, :Kp]).astype(o_ref.dtype)
    o_ref[:, Op:] = mlp(x_ref[:, Kp:]).astype(o_ref.dtype)


def pack_params(params, pack=8, compute_dtype=jnp.bfloat16):
    """One-time packing of the Linear weights into MXU-friendly block-diagonal form.

    Weights are (in, out) (already transposed vs. torch).  `pack` consecutive logical
    rows are folded into one lane-dense row, so each layer's weight becomes a
    block-diagonal matrix of `pack` copies.  Call once at parameter-load time
    (hoisted out of the per-forward path per review).
    """
    assert pack % 2 == 0, "pack must be even (outputs are folded two rows per lane-row)"
    w1, b1, w2, b2, w3, b3 = params
    w1b = jax.scipy.linalg.block_diag(*([w1] * pack)).astype(compute_dtype)
    w2h = jax.scipy.linalg.block_diag(*([w2] * (pack // 2))).astype(compute_dtype)
    w3b = jax.scipy.linalg.block_diag(*([w3] * pack)).astype(compute_dtype)
    b1b = jnp.tile(b1.reshape(1, -1), (1, pack)).astype(jnp.float32)
    b2b = jnp.tile(b2.reshape(1, -1), (1, pack)).astype(jnp.float32)
    b3b = jnp.tile(b3.reshape(1, -1), (1, pack)).astype(jnp.float32)
    return (w1b, b1b, w2h, b2b, w3b, b3b)


def relational_model_forward(m, packed_params, *, tm=2048, x_buffers=2):
    """Applies the 3-layer MLP to the last dim of `m` (any leading dims)."""
    w1b, b1b, w2h, b2b, w3b, b3b = packed_params
    input_size = m.shape[-1]
    Kp = w1b.shape[0]
    Hp = w1b.shape[1]
    Op = w3b.shape[1]
    P = Kp // input_size
    output_size = Op // P
    G = 2 * P                                   # logical rows folded into one kernel row
    compute_dtype = w1b.dtype
    out_dtype = m.dtype

    orig_shape = m.shape
    x = m.reshape(-1, input_size)
    M = x.shape[0]
    pad = (-M) % G
    if pad:
        x = jnp.pad(x, ((0, pad), (0, 0)))      # tiny (< G rows) zero pad
    M_rows = M + pad
    Mq = M_rows // G
    # Free, contiguous reshape: row j = logical rows [G*j, G*(j+1)) concatenated.
    xq = x.astype(compute_dtype).reshape(Mq, 2 * Kp)

    # ---- row-tile selection ----
    tm_eff = min(tm, Mq)
    if tm_eff < Mq:
        tm_eff = max(8, (tm_eff // 8) * 8)
    elif Mq >= 16:
        # A single-step grid would leave one of v7x's two TensorCores idle.
        tm_eff = ((Mq + 1) // 2 + 7) // 8 * 8
    grid = (pl.cdiv(Mq, tm_eff),)

    # ---- explicit VMEM budget (v5e default scoped limit is only 16 MiB) ----
    in_sz = jnp.dtype(compute_dtype).itemsize
    out_sz = jnp.dtype(out_dtype).itemsize
    x_tile = tm_eff * 2 * Kp * in_sz
    o_tile = tm_eff * 2 * Op * out_sz
    h_tile = tm_eff * Hp * 4                    # f32 intermediates
    w_bytes = ((w1b.size + w2h.size + w3b.size) * in_sz
               + (b1b.size + b2b.size + b3b.size) * 4)
    vmem_limit = 2 * (x_tile + o_tile) + 2 * w_bytes + 6 * h_tile + (2 << 20)
    vmem_limit = int(min(max(vmem_limit, 16 << 20), 60 << 20))

    # ---- scheduler hint: MXU-executed (block-diagonal) flops, real bytes ----
    flops = 2 * Mq * 2 * (Kp * Hp + 2 * (Hp // 2) ** 2 + Hp * Op)
    bytes_accessed = xq.size * in_sz + Mq * 2 * Op * out_sz + w_bytes
    cost = pl.CostEstimate(flops=int(flops), transcendentals=0,
                           bytes_accessed=int(bytes_accessed))

    x_spec_kwargs = {}
    if x_buffers != 2:
        # Optional v7x sweep (review item): deeper pipelining on the x input.
        x_spec_kwargs["pipeline_mode"] = pl.Buffered(x_buffers)

    out_p = pl.pallas_call(
        _mlp_kernel,
        out_shape=jax.ShapeDtypeStruct((Mq, 2 * Op), out_dtype),
        grid_spec=pltpu.PrefetchScalarGridSpec(
            num_scalar_prefetch=0,
            grid=grid,
            in_specs=[
                # folded x: tiled over rows, lane-dense (last dim = 2*Kp)
                pl.BlockSpec((tm_eff, 2 * Kp), lambda i: (i, 0), **x_spec_kwargs),
                # weights / biases: full blocks, resident (constant block index)
                pl.BlockSpec(w1b.shape, lambda i: (0, 0)),
                pl.BlockSpec(b1b.shape, lambda i: (0, 0)),
                pl.BlockSpec(w2h.shape, lambda i: (0, 0)),
                pl.BlockSpec(b2b.shape, lambda i: (0, 0)),
                pl.BlockSpec(w3b.shape, lambda i: (0, 0)),
                pl.BlockSpec(b3b.shape, lambda i: (0, 0)),
            ],
            out_specs=pl.BlockSpec((tm_eff, 2 * Op), lambda i: (i, 0)),
        ),
        compiler_params=pltpu.CompilerParams(
            dimension_semantics=("parallel",),
            vmem_limit_bytes=vmem_limit,
        ),
        cost_estimate=cost,
    )(xq, w1b, b1b, w2h, b2b, w3b, b3b)

    # (Mq, 2*Op) is byte-identical to (M_rows, output_size): free reshape; drop pad rows.
    out = out_p.reshape(M_rows, output_size)[:M]
    return out.reshape(orig_shape[:-1] + (output_size,))


def init_params(key, input_size, output_size, hidden_size, dtype=jnp.float32):
    """Deterministic init matching nn.Linear shapes (weights pre-transposed to (in, out))."""
    ks = jax.random.split(key, 6)

    def linear(kw, kb, fan_in, fan_out):
        bound = 1.0 / jnp.sqrt(fan_in)
        w = jax.random.uniform(kw, (fan_in, fan_out), dtype, -bound, bound)
        b = jax.random.uniform(kb, (1, fan_out), dtype, -bound, bound)
        return w, b

    w1, b1 = linear(ks[0], ks[1], input_size, hidden_size)
    w2, b2 = linear(ks[2], ks[3], hidden_size, hidden_size)
    w3, b3 = linear(ks[4], ks[5], hidden_size, output_size)
    return (w1, b1, w2, b2, w3, b3)


if __name__ == "__main__":
    input_size, hidden_size, output_size = 16, 32, 8
    batch, seq = 2, 8  # m: (batch, seq, input_size); Linear acts on the last dim

    key = jax.random.PRNGKey(0)
    k_m, k_p = jax.random.split(key)
    m = jax.random.normal(k_m, (batch, seq, input_size), dtype=jnp.float32)
    params = init_params(k_p, input_size, output_size, hidden_size)
    packed = pack_params(params, pack=8)        # one-time packing (not per-call)

    out = relational_model_forward(m, packed)
    out = jax.block_until_ready(out)

    # Reference in plain f32 JAX (same math as torch nn.Sequential).  The kernel
    # computes the multiplies in bf16 (f32 accumulate), so compare with a bf16-level
    # tolerance.
    w1, b1, w2, b2, w3, b3 = params
    x = m.reshape(-1, input_size)
    ref = jnp.maximum(x @ w1 + b1, 0.0)
    ref = jnp.maximum(ref @ w2 + b2, 0.0)
    ref = (ref @ w3 + b3).reshape(batch, seq, output_size)

    assert out.shape == (batch, seq, output_size)
    err = float(jnp.max(jnp.abs(out.astype(jnp.float32) - ref)))
    assert err < 5e-2, f"max abs error {err}"

    print("KERNEL_OK")
</pallas_src>

<mosaic_0001>
module attributes {stable_mosaic.version = 11 : i64} {
  func.func @_mlp_kernel(%arg0: i32, %arg1: memref<1x256xbf16, #tpu.memory_space<vmem>>, %arg2: memref<128x256xbf16, #tpu.memory_space<vmem>>, %arg3: memref<1x256xf32, #tpu.memory_space<vmem>>, %arg4: memref<128x128xbf16, #tpu.memory_space<vmem>>, %arg5: memref<1x256xf32, #tpu.memory_space<vmem>>, %arg6: memref<256x64xbf16, #tpu.memory_space<vmem>>, %arg7: memref<1x64xf32, #tpu.memory_space<vmem>>, %arg8: memref<1x128xf32, #tpu.memory_space<vmem>>) attributes {dimension_semantics = [#tpu.dimension_semantics<parallel>], iteration_bounds = array<i64: 1>, scalar_prefetch = 0 : i64, scratch_operands = 0 : i64, tpu.core_type = #tpu.core_type<tc>, window_params = [{transform_indices = @transform_0, window_bounds = array<i64: 1, 256>}, {pipeline_mode = #tpu.pipeline_mode<synchronous>, transform_indices = @transform_1, window_bounds = array<i64: 128, 256>}, {pipeline_mode = #tpu.pipeline_mode<synchronous>, transform_indices = @transform_2, window_bounds = array<i64: 1, 256>}, {pipeline_mode = #tpu.pipeline_mode<synchronous>, transform_indices = @transform_3, window_bounds = array<i64: 128, 128>}, {pipeline_mode = #tpu.pipeline_mode<synchronous>, transform_indices = @transform_4, window_bounds = array<i64: 1, 256>}, {pipeline_mode = #tpu.pipeline_mode<synchronous>, transform_indices = @transform_5, window_bounds = array<i64: 256, 64>}, {pipeline_mode = #tpu.pipeline_mode<synchronous>, transform_indices = @transform_6, window_bounds = array<i64: 1, 64>}, {transform_indices = @transform_7, window_bounds = array<i64: 1, 128>}]} {
    %c0 = arith.constant 0 : index
    %c0_0 = arith.constant 0 : index
    %0 = vector.load %arg2[%c0, %c0_0] : memref<128x256xbf16, #tpu.memory_space<vmem>>, vector<128x256xbf16>
    %c0_1 = arith.constant 0 : index
    %c0_2 = arith.constant 0 : index
    %1 = vector.load %arg4[%c0_1, %c0_2] : memref<128x128xbf16, #tpu.memory_space<vmem>>, vector<128x128xbf16>
    %c0_3 = arith.constant 0 : index
    %c0_4 = arith.constant 0 : index
    %2 = vector.load %arg6[%c0_3, %c0_4] : memref<256x64xbf16, #tpu.memory_space<vmem>>, vector<256x64xbf16>
    %c0_5 = arith.constant 0 : index
    %c0_6 = arith.constant 0 : index
    %3 = vector.load %arg3[%c0_5, %c0_6] : memref<1x256xf32, #tpu.memory_space<vmem>>, vector<1x256xf32>
    %c0_7 = arith.constant 0 : index
    %c0_8 = arith.constant 0 : index
    %4 = vector.load %arg5[%c0_7, %c0_8] : memref<1x256xf32, #tpu.memory_space<vmem>>, vector<1x256xf32>
    %c0_9 = arith.constant 0 : index
    %c0_10 = arith.constant 0 : index
    %5 = vector.load %arg7[%c0_9, %c0_10] : memref<1x64xf32, #tpu.memory_space<vmem>>, vector<1x64xf32>
    %c0_11 = arith.constant 0 : index
    %c0_12 = arith.constant 0 : index
    %6 = vector.load %arg1[%c0_11, %c0_12] : memref<1x256xbf16, #tpu.memory_space<vmem>>, vector<1x128xbf16>
    %cst = arith.constant dense<0.000000e+00> : vector<1x256xf32>
    %7 = tpu.matmul %6, %0, %cst {dimension_numbers = #tpu.dot_dimension_numbers<[1], [0], [0], [1], [0, 0, 1, 1], [], []>} : vector<1x128xbf16>, vector<128x256xbf16>, vector<1x256xf32> -> vector<1x256xf32>
    %8 = arith.addf %7, %3 : vector<1x256xf32>
    %cst_13 = arith.constant 0.000000e+00 : f32
    %9 = vector.broadcast %cst_13 : f32 to vector<1x256xf32>
    %10 = arith.maximumf %8, %9 : vector<1x256xf32>
    %11 = arith.truncf %10 : vector<1x256xf32> to vector<1x256xbf16>
    %12 = vector.extract_strided_slice %11 {offsets = [0, 0], sizes = [1, 128], strides = [1, 1]} : vector<1x256xbf16> to vector<1x128xbf16>
    %cst_14 = arith.constant dense<0.000000e+00> : vector<1x128xf32>
    %13 = tpu.matmul %12, %1, %cst_14 {dimension_numbers = #tpu.dot_dimension_numbers<[1], [0], [0], [1], [0, 0, 1, 1], [], []>} : vector<1x128xbf16>, vector<128x128xbf16>, vector<1x128xf32> -> vector<1x128xf32>
    %14 = vector.extract_strided_slice %11 {offsets = [0, 128], sizes = [1, 128], strides = [1, 1]} : vector<1x256xbf16> to vector<1x128xbf16>
    %cst_15 = arith.constant dense<0.000000e+00> : vector<1x128xf32>
    %15 = tpu.matmul %14, %1, %cst_15 {dimension_numbers = #tpu.dot_dimension_numbers<[1], [0], [0], [1], [0, 0, 1, 1], [], []>} : vector<1x128xbf16>, vector<128x128xbf16>, vector<1x128xf32> -> vector<1x128xf32>
    %16 = tpu.concatenate %13, %15 in 1 : vector<1x128xf32>, vector<1x128xf32> -> vector<1x256xf32>
    %17 = arith.addf %16, %4 : vector<1x256xf32>
    %cst_16 = arith.constant 0.000000e+00 : f32
    %18 = vector.broadcast %cst_16 : f32 to vector<1x256xf32>
    %19 = arith.maximumf %17, %18 : vector<1x256xf32>
    %20 = arith.truncf %19 : vector<1x256xf32> to vector<1x256xbf16>
    %cst_17 = arith.constant dense<0.000000e+00> : vector<1x64xf32>
    %21 = tpu.matmul %20, %2, %cst_17 {dimension_numbers = #tpu.dot_dimension_numbers<[1], [0], [0], [1], [0, 0, 1, 1], [], []>} : vector<1x256xbf16>, vector<256x64xbf16>, vector<1x64xf32> -> vector<1x64xf32>
    %22 = arith.addf %21, %5 : vector<1x64xf32>
    %c0_18 = arith.constant 0 : index
    %c0_19 = arith.constant 0 : index
    %23 = vector.load %arg8[%c0_18, %c0_19] : memref<1x128xf32, #tpu.memory_space<vmem>>, vector<1x64xf32>
    tpu.vector_store %arg8[%c0_18, %c0_19], %22 {strides = array<i32>} : memref<1x128xf32, #tpu.memory_space<vmem>>, vector<1x64xf32>,
    %c0_20 = arith.constant 0 : index
    %c128 = arith.constant 128 : index
    %24 = vector.load %arg1[%c0_20, %c128] : memref<1x256xbf16, #tpu.memory_space<vmem>>, vector<1x128xbf16>
    %cst_21 = arith.constant dense<0.000000e+00> : vector<1x256xf32>
    %25 = tpu.matmul %24, %0, %cst_21 {dimension_numbers = #tpu.dot_dimension_numbers<[1], [0], [0], [1], [0, 0, 1, 1], [], []>} : vector<1x128xbf16>, vector<128x256xbf16>, vector<1x256xf32> -> vector<1x256xf32>
    %26 = arith.addf %25, %3 : vector<1x256xf32>
    %cst_22 = arith.constant 0.000000e+00 : f32
    %27 = vector.broadcast %cst_22 : f32 to vector<1x256xf32>
    %28 = arith.maximumf %26, %27 : vector<1x256xf32>
    %29 = arith.truncf %28 : vector<1x256xf32> to vector<1x256xbf16>
    %30 = vector.extract_strided_slice %29 {offsets = [0, 0], sizes = [1, 128], strides = [1, 1]} : vector<1x256xbf16> to vector<1x128xbf16>
    %cst_23 = arith.constant dense<0.000000e+00> : vector<1x128xf32>
    %31 = tpu.matmul %30, %1, %cst_23 {dimension_numbers = #tpu.dot_dimension_numbers<[1], [0], [0], [1], [0, 0, 1, 1], [], []>} : vector<1x128xbf16>, vector<128x128xbf16>, vector<1x128xf32> -> vector<1x128xf32>
    %32 = vector.extract_strided_slice %29 {offsets = [0, 128], sizes = [1, 128], strides = [1, 1]} : vector<1x256xbf16> to vector<1x128xbf16>
    %cst_24 = arith.constant dense<0.000000e+00> : vector<1x128xf32>
    %33 = tpu.matmul %32, %1, %cst_24 {dimension_numbers = #tpu.dot_dimension_numbers<[1], [0], [0], [1], [0, 0, 1, 1], [], []>} : vector<1x128xbf16>, vector<128x128xbf16>, vector<1x128xf32> -> vector<1x128xf32>
    %34 = tpu.concatenate %31, %33 in 1 : vector<1x128xf32>, vector<1x128xf32> -> vector<1x256xf32>
    %35 = arith.addf %34, %4 : vector<1x256xf32>
    %cst_25 = arith.constant 0.000000e+00 : f32
    %36 = vector.broadcast %cst_25 : f32 to vector<1x256xf32>
    %37 = arith.maximumf %35, %36 : vector<1x256xf32>
    %38 = arith.truncf %37 : vector<1x256xf32> to vector<1x256xbf16>
    %cst_26 = arith.constant dense<0.000000e+00> : vector<1x64xf32>
    %39 = tpu.matmul %38, %2, %cst_26 {dimension_numbers = #tpu.dot_dimension_numbers<[1], [0], [0], [1], [0, 0, 1, 1], [], []>} : vector<1x256xbf16>, vector<256x64xbf16>, vector<1x64xf32> -> vector<1x64xf32>
    %40 = arith.addf %39, %5 : vector<1x64xf32>
    %c0_27 = arith.constant 0 : index
    %c64 = arith.constant 64 : index
    %41 = vector.load %arg8[%c0_27, %c64] : memref<1x128xf32, #tpu.memory_space<vmem>>, vector<1x64xf32>
    tpu.vector_store %arg8[%c0_27, %c64], %40 {strides = array<i32>} : memref<1x128xf32, #tpu.memory_space<vmem>>, vector<1x64xf32>,
    return
  }
  func.func @transform_0(%arg0: i32) -> (i32, i32) {
    %c0_i32 = arith.constant 0 : i32
    %c0_i32_0 = arith.constant 0 : i32
    return %arg0, %c0_i32 : i32, i32
  }
  func.func @transform_1(%arg0: i32) -> (i32, i32) {
    %c0_i32 = arith.constant 0 : i32
    %c0_i32_0 = arith.constant 0 : i32
    %c0_i32_1 = arith.constant 0 : i32
    return %c0_i32, %c0_i32_0 : i32, i32
  }
  func.func @transform_2(%arg0: i32) -> (i32, i32) {
    %c0_i32 = arith.constant 0 : i32
    %c0_i32_0 = arith.constant 0 : i32
    %c0_i32_1 = arith.constant 0 : i32
    return %c0_i32, %c0_i32_0 : i32, i32
  }
  func.func @transform_3(%arg0: i32) -> (i32, i32) {
    %c0_i32 = arith.constant 0 : i32
    %c0_i32_0 = arith.constant 0 : i32
    %c0_i32_1 = arith.constant 0 : i32
    return %c0_i32, %c0_i32_0 : i32, i32
  }
  func.func @transform_4(%arg0: i32) -> (i32, i32) {
    %c0_i32 = arith.constant 0 : i32
    %c0_i32_0 = arith.constant 0 : i32
    %c0_i32_1 = arith.constant 0 : i32
    return %c0_i32, %c0_i32_0 : i32, i32
  }
  func.func @transform_5(%arg0: i32) -> (i32, i32) {
    %c0_i32 = arith.constant 0 : i32
    %c0_i32_0 = arith.constant 0 : i32
    %c0_i32_1 = arith.constant 0 : i32
    return %c0_i32, %c0_i32_0 : i32, i32
  }
  func.func @transform_6(%arg0: i32) -> (i32, i32) {
    %c0_i32 = arith.constant 0 : i32
    %c0_i32_0 = arith.constant 0 : i32
    %c0_i32_1 = arith.constant 0 : i32
    return %c0_i32, %c0_i32_0 : i32, i32
  }
  func.func @transform_7(%arg0: i32) -> (i32, i32) {
    %c0_i32 = arith.constant 0 : i32
    %c0_i32_0 = arith.constant 0 : i32
    return %arg0, %c0_i32 : i32, i32
  }
}

</mosaic_0001>

<llo_original>
// kernel: tpu_custom_call.1
$region0: #{tpu_custom_call.1}
  #allocation0 [shape = 'u32[]', space=smem, size = 0x4, offset = 0x4, fixed_abs, tag = 'smem constant byte address 0x4 - core index']
  #allocation1 [shape = 'u32[144,128]{1,0:T(1,128)}', space=vmem, size = 0x12000, scoped, tag = 'internal scratch']
  %s0 = inlined_call_operand.hbm [shape: bf16[1,256], index: 0, kind: input, shape index: {}]
  %s1 = inlined_call_operand.vmem [shape: bf16[128,256], index: 1, kind: input, shape index: {}]
  %s2 = inlined_call_operand.vmem [shape: f32[1,256], index: 2, kind: input, shape index: {}]
  %s3 = inlined_call_operand.vmem [shape: bf16[128,128], index: 3, kind: input, shape index: {}]
  %s4 = inlined_call_operand.vmem [shape: f32[1,256], index: 4, kind: input, shape index: {}]
  %s5 = inlined_call_operand.vmem [shape: bf16[256,64], index: 5, kind: input, shape index: {}]
  %s6 = inlined_call_operand.vmem [shape: f32[1,64], index: 6, kind: input, shape index: {}]
  %s7 = inlined_call_operand.hbm [shape: f32[1,128], index: 7, kind: output, shape index: {}]
  %s8 = sld [smem:[#allocation0]]
  $region42: #{tpu_custom_call.1} parent=0
    _
  %s10 = ssub.s32 1, %s8
  %s11 = scalar_select 0, %s10, %s8
  $region1: #{tpu_custom_call.1} parent=0
    #allocation2 [shape = 'u8[1024]{0}', space=vmem, size = 0x400, scoped, tag = 'input window, operand 0, single buffered']
    #allocation3 [shape = 's32[1]{0}', space=sflag, size = 0x4, scoped, tag = 'scoped memory for tpu_custom_call.1']
    #allocation4 [shape = 's32[1]{0}', space=sflag, size = 0x4, scoped, tag = 'scoped memory for tpu_custom_call.1']
    #allocation5 [shape = 'u8[512]{0}', space=vmem, size = 0x400, scoped, tag = 'output window, operand 0, single buffered']
    %12 = vsyncpa [#allocation3], 0
    %13 = vsyncpa [#allocation4], 0
    // Predicated region
    $region2: #{tpu_custom_call.1} parent=1 // pred_check
      _
    $region3: #{tpu_custom_call.1} parent=1 // pred_check_branch
      %15 = sbr.rel (0) target = $region5
    $region4: #{tpu_custom_call.1} parent=1 // pred_region
      %s17 = ssub.s32 32, 32
      %18 = vsyncadd [#allocation3], %s17
      %s20 = sshll.u32 [#allocation2], 4
      %s21 = int_to_ptr.vmem [resolvable:$true] %s20
      %23 = dma.hbm_to_vmem [thread:$0]  %s0, 32, %s21, [#allocation3]
    $region5: #{tpu_custom_call.1} parent=1 // pred_fallthru
      _
    // Predicated region
    $region6: #{tpu_custom_call.1} parent=1 // pred_check
      _
    $region7: #{tpu_custom_call.1} parent=1 // pred_check_branch
      %25 = sbr.rel (0) target = $region9
    $region8: #{tpu_custom_call.1} parent=1 // pred_region
      _
    $region9: #{tpu_custom_call.1} parent=1 // pred_fallthru
      _
    // Predicated region
    $region10: #{tpu_custom_call.1} parent=1 // pred_check
      _
    $region11: #{tpu_custom_call.1} parent=1 // pred_check_branch
      %27 = sbr.rel (0) target = $region13
    $region12: #{tpu_custom_call.1} parent=1 // pred_region
      _
    $region13: #{tpu_custom_call.1} parent=1 // pred_fallthru
      _
    // Predicated region
    $region14: #{tpu_custom_call.1} parent=1 // pred_check
      _
    $region15: #{tpu_custom_call.1} parent=1 // pred_check_branch
      %29 = sbr.rel (0) target = $region17
    $region16: #{tpu_custom_call.1} parent=1 // pred_region
      _
    $region17: #{tpu_custom_call.1} parent=1 // pred_fallthru
      _
    // Predicated region
    $region18: #{tpu_custom_call.1} parent=1 // pred_check
      _
    $region19: #{tpu_custom_call.1} parent=1 // pred_check_branch
      %31 = sbr.rel (0) target = $region21
    $region20: #{tpu_custom_call.1} parent=1 // pred_region
      _
    $region21: #{tpu_custom_call.1} parent=1 // pred_fallthru
      _
    // Predicated region
    $region22: #{tpu_custom_call.1} parent=1 // pred_check
      _
    $region23: #{tpu_custom_call.1} parent=1 // pred_check_branch
      %33 = sbr.rel (0) target = $region25
    $region24: #{tpu_custom_call.1} parent=1 // pred_region
      _
    $region25: #{tpu_custom_call.1} parent=1 // pred_fallthru
      _
    // Predicated region
    $region26: #{tpu_custom_call.1} parent=1 // pred_check
      _
    $region27: #{tpu_custom_call.1} parent=1 // pred_check_branch
      %35 = sbr.rel (0) target = $region29
    $region28: #{tpu_custom_call.1} parent=1 // pred_region
      _
    $region29: #{tpu_custom_call.1} parent=1 // pred_fallthru
      _
    // Predicated region
    $region30: #{tpu_custom_call.1} parent=1 // pred_check
      _
    $region31: #{tpu_custom_call.1} parent=1 // pred_check_branch
      %37 = sbr.rel (0) target = $region33
    $region32: #{tpu_custom_call.1} parent=1 // pred_region
      %38 = dma.done [#allocation3], 32
    $region33: #{tpu_custom_call.1} parent=1 // pred_fallthru
      _
    %v40 = vld [vmem:[%s1] sm:$0xff]
    %v41 = vld [vmem:[%s1 + $0x8] sm:$0xff]
    %v42 = vld [vmem:[%s1 + $0x10] sm:$0xff]
    %v43 = vld [vmem:[%s1 + $0x18] sm:$0xff]
    %v44 = vld [vmem:[%s1 + $0x20] sm:$0xff]
    %v45 = vld [vmem:[%s1 + $0x28] sm:$0xff]
    %v46 = vld [vmem:[%s1 + $0x30] sm:$0xff]
    %v47 = vld [vmem:[%s1 + $0x38] sm:$0xff]
    %v48 = vld [vmem:[%s1 + $0x40] sm:$0xff]
    %v49 = vld [vmem:[%s1 + $0x48] sm:$0xff]
    %v50 = vld [vmem:[%s1 + $0x50] sm:$0xff]
    %v51 = vld [vmem:[%s1 + $0x58] sm:$0xff]
    %v52 = vld [vmem:[%s1 + $0x60] sm:$0xff]
    %v53 = vld [vmem:[%s1 + $0x68] sm:$0xff]
    %v54 = vld [vmem:[%s1 + $0x70] sm:$0xff]
    %v55 = vld [vmem:[%s1 + $0x78] sm:$0xff]
    %v56 = vld [vmem:[%s3] sm:$0xf]
    %v57 = vld [vmem:[%s3 + $0x4] sm:$0xf]
    %v58 = vld [vmem:[%s3 + $0x8] sm:$0xf]
    %v59 = vld [vmem:[%s3 + $0xc] sm:$0xf]
    %v60 = vld [vmem:[%s3 + $0x10] sm:$0xf]
    %v61 = vld [vmem:[%s3 + $0x14] sm:$0xf]
    %v62 = vld [vmem:[%s3 + $0x18] sm:$0xf]
    %v63 = vld [vmem:[%s3 + $0x1c] sm:$0xf]
    %v64 = vld [vmem:[%s3 + $0x20] sm:$0xf]
    %v65 = vld [vmem:[%s3 + $0x24] sm:$0xf]
    %v66 = vld [vmem:[%s3 + $0x28] sm:$0xf]
    %v67 = vld [vmem:[%s3 + $0x2c] sm:$0xf]
    %v68 = vld [vmem:[%s3 + $0x30] sm:$0xf]
    %v69 = vld [vmem:[%s3 + $0x34] sm:$0xf]
    %v70 = vld [vmem:[%s3 + $0x38] sm:$0xf]
    %v71 = vld [vmem:[%s3 + $0x3c] sm:$0xf]
    %v72 = vld [vmem:[%s5] sm:$0xf]
    %v73 = vld [vmem:[%s5 + $0x4] sm:$0xf]
    %v74 = vld [vmem:[%s5 + $0x8] sm:$0xf]
    %v75 = vld [vmem:[%s5 + $0xc] sm:$0xf]
    %v76 = vld [vmem:[%s5 + $0x10] sm:$0xf]
    %v77 = vld [vmem:[%s5 + $0x14] sm:$0xf]
    %v78 = vld [vmem:[%s5 + $0x18] sm:$0xf]
    %v79 = vld [vmem:[%s5 + $0x1c] sm:$0xf]
    %v80 = vld [vmem:[%s5 + $0x20] sm:$0xf]
    %v81 = vld [vmem:[%s5 + $0x24] sm:$0xf]
    %v82 = vld [vmem:[%s5 + $0x28] sm:$0xf]
    %v83 = vld [vmem:[%s5 + $0x2c] sm:$0xf]
    %v84 = vld [vmem:[%s5 + $0x30] sm:$0xf]
    %v85 = vld [vmem:[%s5 + $0x34] sm:$0xf]
    %v86 = vld [vmem:[%s5 + $0x38] sm:$0xf]
    %v87 = vld [vmem:[%s5 + $0x3c] sm:$0xf]
    %v88 = vld [vmem:[%s5 + $0x40] sm:$0xf]
    %v89 = vld [vmem:[%s5 + $0x44] sm:$0xf]
    %v90 = vld [vmem:[%s5 + $0x48] sm:$0xf]
    %v91 = vld [vmem:[%s5 + $0x4c] sm:$0xf]
    %v92 = vld [vmem:[%s5 + $0x50] sm:$0xf]
    %v93 = vld [vmem:[%s5 + $0x54] sm:$0xf]
    %v94 = vld [vmem:[%s5 + $0x58] sm:$0xf]
    %v95 = vld [vmem:[%s5 + $0x5c] sm:$0xf]
    %v96 = vld [vmem:[%s5 + $0x60] sm:$0xf]
    %v97 = vld [vmem:[%s5 + $0x64] sm:$0xf]
    %v98 = vld [vmem:[%s5 + $0x68] sm:$0xf]
    %v99 = vld [vmem:[%s5 + $0x6c] sm:$0xf]
    %v100 = vld [vmem:[%s5 + $0x70] sm:$0xf]
    %v101 = vld [vmem:[%s5 + $0x74] sm:$0xf]
    %v102 = vld [vmem:[%s5 + $0x78] sm:$0xf]
    %v103 = vld [vmem:[%s5 + $0x7c] sm:$0xf]
    %v104 = vld [vmem:[%s2] sm:$0x3]
    %v105 = vld [vmem:[%s4] sm:$0x3]
    %v106 = vld [vmem:[%s6] sm:$0x1]
    %v107 = vld [vmem:[#allocation2] sm:$0x1]
    %v124 = vunpack.c.l.b16 %v40
    %v125 = vunpack.c.h.b16 %v40
    %v126 = vunpack.c.l.b16 %v41
    %v127 = vunpack.c.h.b16 %v41
    %v128 = vunpack.c.l.b16 %v42
    %v129 = vunpack.c.h.b16 %v42
    %v130 = vunpack.c.l.b16 %v43
    %v131 = vunpack.c.h.b16 %v43
    %v132 = vunpack.c.l.b16 %v44
    %v133 = vunpack.c.h.b16 %v44
    %v134 = vunpack.c.l.b16 %v45
    %v135 = vunpack.c.h.b16 %v45
    %v136 = vunpack.c.l.b16 %v46
    %v137 = vunpack.c.h.b16 %v46
    %v138 = vunpack.c.l.b16 %v47
    %v139 = vunpack.c.h.b16 %v47
    %v140 = vunpack.c.l.b16 %v48
    %v141 = vunpack.c.h.b16 %v48
    %v142 = vunpack.c.l.b16 %v49
    %v143 = vunpack.c.h.b16 %v49
    %v144 = vunpack.c.l.b16 %v50
    %v145 = vunpack.c.h.b16 %v50
    %v146 = vunpack.c.l.b16 %v51
    %v147 = vunpack.c.h.b16 %v51
    %v148 = vunpack.c.l.b16 %v52
    %v149 = vunpack.c.h.b16 %v52
    %v150 = vunpack.c.l.b16 %v53
    %v151 = vunpack.c.h.b16 %v53
    %v152 = vunpack.c.l.b16 %v54
    %v153 = vunpack.c.h.b16 %v54
    %v154 = vunpack.c.l.b16 %v55
    %v155 = vunpack.c.h.b16 %v55
    %v156 = vpack.c.b16 %v126, %v124
    %v157 = vpack.c.b16 %v127, %v125
    %v158 = vpack.c.b16 %v130, %v128
    %v159 = vpack.c.b16 %v131, %v129
    %v160 = vpack.c.b16 %v134, %v132
    %v161 = vpack.c.b16 %v135, %v133
    %v162 = vpack.c.b16 %v138, %v136
    %v163 = vpack.c.b16 %v139, %v137
    %v164 = vpack.c.b16 %v142, %v140
    %v165 = vpack.c.b16 %v143, %v141
    %v166 = vpack.c.b16 %v146, %v144
    %v167 = vpack.c.b16 %v147, %v145
    %v168 = vpack.c.b16 %v150, %v148
    %v169 = vpack.c.b16 %v151, %v149
    %v170 = vpack.c.b16 %v154, %v152
    %v171 = vpack.c.b16 %v155, %v153
    %v189 = vlaneseq
    %v190 = vshrl.u32 %v189, 7
    %v191 = vsub.s32 0, %v190
    %v192 = vrot.slane %v104, %v191
    %v193 = vlaneseq
    %v194 = vshrl.u32 %v193, 7
    %v195 = vsub.s32 1, %v194
    %v196 = vrot.slane %v104, %v195
    %199 = vmatprep.subr.bf16.mxu0 %v171
    %200 = vmatpush1.bf16.msra.mxu0 %v170
    %201 = vmatprep.subr.bf16.mxu0 %v169
    %202 = vmatpush1.bf16.msra.mxu0 %v168
    %203 = vmatprep.subr.bf16.mxu0 %v167
    %204 = vmatpush1.bf16.msra.mxu0 %v166
    %205 = vmatprep.subr.bf16.mxu0 %v165
    %206 = vmatpush1.bf16.msra.mxu0 %v164
    %207 = vmatprep.subr.bf16.mxu0 %v163
    %208 = vmatpush1.bf16.msra.mxu0 %v162
    %209 = vmatprep.subr.bf16.mxu0 %v161
    %210 = vmatpush1.bf16.msra.mxu0 %v160
    %211 = vmatprep.subr.bf16.mxu0 %v159
    %212 = vmatpush1.bf16.msra.mxu0 %v158
    %213 = vmatprep.subr.bf16.mxu0 %v157
    %214 = vmatpush1.bf16.msra.mxu0 %v156
    %215 = vmatprep.subr.bf16.mxu0 0
    %216 = vmatpush2.bf16.msra.mxu0 0
    %217 = vmatprep.subr.bf16.mxu0 0
    %218 = vmatpush2.bf16.msra.mxu0 0
    %219 = vmatprep.subr.bf16.mxu0 0
    %220 = vmatpush2.bf16.msra.mxu0 0
    %221 = vmatprep.subr.bf16.mxu0 0
    %222 = vmatpush2.bf16.msra.mxu0 0
    %223 = vmatprep.subr.bf16.mxu0 0
    %224 = vmatpush2.bf16.msra.mxu0 0
    %225 = vmatprep.subr.bf16.mxu0 0
    %226 = vmatpush2.bf16.msra.mxu0 0
    %227 = vmatprep.subr.bf16.mxu0 0
    %228 = vmatpush2.bf16.msra.mxu0 0
    %229 = vmatprep.subr.bf16.mxu0 0
    %230 = vmatpush2.bf16.msra.mxu0 0
    %231 = vmatprep.mubr.bf16.mxu0 0
    %232 = vmatmul.mubr.bf16.gmra.mxu0 %v107
    %v233 = vpop.f32.mrf.mxu0
    %v234 = vadd.f32 %v192, %v233
    %v235 = vpop.f32.mrf.mxu0
    %v236 = vadd.f32 %v196, %v235
    %v237 = vpop.f32.mrf.mxu0
    %v238 = vpop.f32.mrf.mxu0
    %239 = vdwg.mxu0
    %v240 = vmax.f32 %v234, 0.0
    %v241 = vmax.f32 %v236, 0.0
    %v242 = vpack.c.bf16 %v240, %v240
    %v243 = vpack.c.bf16 %v241, %v241
    %v260 = vunpack.c.l.b16 %v56
    %v261 = vunpack.c.l.b16 %v57
    %v262 = vunpack.c.l.b16 %v58
    %v263 = vunpack.c.l.b16 %v59
    %v264 = vunpack.c.l.b16 %v60
    %v265 = vunpack.c.l.b16 %v61
    %v266 = vunpack.c.l.b16 %v62
    %v267 = vunpack.c.l.b16 %v63
    %v268 = vunpack.c.l.b16 %v64
    %v269 = vunpack.c.l.b16 %v65
    %v270 = vunpack.c.l.b16 %v66
    %v271 = vunpack.c.l.b16 %v67
    %v272 = vunpack.c.l.b16 %v68
    %v273 = vunpack.c.l.b16 %v69
    %v274 = vunpack.c.l.b16 %v70
    %v275 = vunpack.c.l.b16 %v71
    %v276 = vpack.c.b16 %v261, %v260
    %v277 = vpack.c.b16 %v263, %v262
    %v278 = vpack.c.b16 %v265, %v264
    %v279 = vpack.c.b16 %v267, %v266
    %v280 = vpack.c.b16 %v269, %v268
    %v281 = vpack.c.b16 %v271, %v270
    %v282 = vpack.c.b16 %v273, %v272
    %v283 = vpack.c.b16 %v275, %v274
    %292 = vmatprep.subr.bf16.mxu0 0
    %293 = vmatpush1.bf16.msra.mxu0 %v283
    %294 = vmatprep.subr.bf16.mxu0 0
    %295 = vmatpush1.bf16.msra.mxu0 %v282
    %296 = vmatprep.subr.bf16.mxu0 0
    %297 = vmatpush1.bf16.msra.mxu0 %v281
    %298 = vmatprep.subr.bf16.mxu0 0
    %299 = vmatpush1.bf16.msra.mxu0 %v280
    %300 = vmatprep.subr.bf16.mxu0 0
    %301 = vmatpush1.bf16.msra.mxu0 %v279
    %302 = vmatprep.subr.bf16.mxu0 0
    %303 = vmatpush1.bf16.msra.mxu0 %v278
    %304 = vmatprep.subr.bf16.mxu0 0
    %305 = vmatpush1.bf16.msra.mxu0 %v277
    %306 = vmatprep.subr.bf16.mxu0 0
    %307 = vmatpush1.bf16.msra.mxu0 %v276
    %308 = vmatprep.subr.bf16.mxu0 0
    %309 = vmatpush2.bf16.msra.mxu0 0
    %310 = vmatprep.subr.bf16.mxu0 0
    %311 = vmatpush2.bf16.msra.mxu0 0
    %312 = vmatprep.subr.bf16.mxu0 0
    %313 = vmatpush2.bf16.msra.mxu0 0
    %314 = vmatprep.subr.bf16.mxu0 0
    %315 = vmatpush2.bf16.msra.mxu0 0
    %316 = vmatprep.subr.bf16.mxu0 0
    %317 = vmatpush2.bf16.msra.mxu0 0
    %318 = vmatprep.subr.bf16.mxu0 0
    %319 = vmatpush2.bf16.msra.mxu0 0
    %320 = vmatprep.subr.bf16.mxu0 0
    %321 = vmatpush2.bf16.msra.mxu0 0
    %322 = vmatprep.subr.bf16.mxu0 0
    %323 = vmatpush2.bf16.msra.mxu0 0
    %324 = vmatprep.mubr.bf16.mxu0 0
    %325 = vmatmul.mubr.bf16.gmra.mxu0 %v242
    %v326 = vpop.f32.mrf.mxu0
    %v327 = vadd.f32 0.0, %v326
    %v328 = vpop.f32.mrf.mxu0
    %v329 = vpop.f32.mrf.mxu0
    %v330 = vpop.f32.mrf.mxu0
    %331 = vdwg.mxu0
    %332 = vmatprep.subr.bf16.mxu0 0
    %333 = vmatpush1.bf16.msra.mxu0 %v283
    %334 = vmatprep.subr.bf16.mxu0 0
    %335 = vmatpush1.bf16.msra.mxu0 %v282
    %336 = vmatprep.subr.bf16.mxu0 0
    %337 = vmatpush1.bf16.msra.mxu0 %v281
    %338 = vmatprep.subr.bf16.mxu0 0
    %339 = vmatpush1.bf16.msra.mxu0 %v280
    %340 = vmatprep.subr.bf16.mxu0 0
    %341 = vmatpush1.bf16.msra.mxu0 %v279
    %342 = vmatprep.subr.bf16.mxu0 0
    %343 = vmatpush1.bf16.msra.mxu0 %v278
    %344 = vmatprep.subr.bf16.mxu0 0
    %345 = vmatpush1.bf16.msra.mxu0 %v277
    %346 = vmatprep.subr.bf16.mxu0 0
    %347 = vmatpush1.bf16.msra.mxu0 %v276
    %348 = vmatprep.subr.bf16.mxu0 0
    %349 = vmatpush2.bf16.msra.mxu0 0
    %350 = vmatprep.subr.bf16.mxu0 0
    %351 = vmatpush2.bf16.msra.mxu0 0
    %352 = vmatprep.subr.bf16.mxu0 0
    %353 = vmatpush2.bf16.msra.mxu0 0
    %354 = vmatprep.subr.bf16.mxu0 0
    %355 = vmatpush2.bf16.msra.mxu0 0
    %356 = vmatprep.subr.bf16.mxu0 0
    %357 = vmatpush2.bf16.msra.mxu0 0
    %358 = vmatprep.subr.bf16.mxu0 0
    %359 = vmatpush2.bf16.msra.mxu0 0
    %360 = vmatprep.subr.bf16.mxu0 0
    %361 = vmatpush2.bf16.msra.mxu0 0
    %362 = vmatprep.subr.bf16.mxu0 0
    %363 = vmatpush2.bf16.msra.mxu0 0
    %364 = vmatprep.mubr.bf16.mxu0 0
    %365 = vmatmul.mubr.bf16.gmra.mxu0 %v243
    %v366 = vpop.f32.mrf.mxu0
    %v367 = vadd.f32 0.0, %v366
    %v368 = vpop.f32.mrf.mxu0
    %v369 = vpop.f32.mrf.mxu0
    %v370 = vpop.f32.mrf.mxu0
    %371 = vdwg.mxu0
    %v373 = vlaneseq
    %v374 = vshrl.u32 %v373, 7
    %v375 = vsub.s32 0, %v374
    %v376 = vrot.slane %v105, %v375
    %v377 = vlaneseq
    %v378 = vshrl.u32 %v377, 7
    %v379 = vsub.s32 1, %v378
    %v380 = vrot.slane %v105, %v379
    %v383 = vadd.f32 %v327, %v376
    %v384 = vadd.f32 %v367, %v380
    %v385 = vmax.f32 %v383, 0.0
    %v386 = vmax.f32 %v384, 0.0
    %v387 = vpack.c.bf16 %v385, %v385
    %v388 = vpack.c.bf16 %v386, %v386
    %v421 = vunpack.c.l.b16 %v72
    %v422 = vunpack.c.l.b16 %v73
    %v423 = vunpack.c.l.b16 %v74
    %v424 = vunpack.c.l.b16 %v75
    %v425 = vunpack.c.l.b16 %v76
    %v426 = vunpack.c.l.b16 %v77
    %v427 = vunpack.c.l.b16 %v78
    %v428 = vunpack.c.l.b16 %v79
    %v429 = vunpack.c.l.b16 %v80
    %v430 = vunpack.c.l.b16 %v81
    %v431 = vunpack.c.l.b16 %v82
    %v432 = vunpack.c.l.b16 %v83
    %v433 = vunpack.c.l.b16 %v84
    %v434 = vunpack.c.l.b16 %v85
    %v435 = vunpack.c.l.b16 %v86
    %v436 = vunpack.c.l.b16 %v87
    %v437 = vunpack.c.l.b16 %v88
    %v438 = vunpack.c.l.b16 %v89
    %v439 = vunpack.c.l.b16 %v90
    %v440 = vunpack.c.l.b16 %v91
    %v441 = vunpack.c.l.b16 %v92
    %v442 = vunpack.c.l.b16 %v93
    %v443 = vunpack.c.l.b16 %v94
    %v444 = vunpack.c.l.b16 %v95
    %v445 = vunpack.c.l.b16 %v96
    %v446 = vunpack.c.l.b16 %v97
    %v447 = vunpack.c.l.b16 %v98
    %v448 = vunpack.c.l.b16 %v99
    %v449 = vunpack.c.l.b16 %v100
    %v450 = vunpack.c.l.b16 %v101
    %v451 = vunpack.c.l.b16 %v102
    %v452 = vunpack.c.l.b16 %v103
    %v453 = vpack.c.b16 %v422, %v421
    %v454 = vpack.c.b16 %v424, %v423
    %v455 = vpack.c.b16 %v426, %v425
    %v456 = vpack.c.b16 %v428, %v427
    %v457 = vpack.c.b16 %v430, %v429
    %v458 = vpack.c.b16 %v432, %v431
    %v459 = vpack.c.b16 %v434, %v433
    %v460 = vpack.c.b16 %v436, %v435
    %v461 = vpack.c.b16 %v438, %v437
    %v462 = vpack.c.b16 %v440, %v439
    %v463 = vpack.c.b16 %v442, %v441
    %v464 = vpack.c.b16 %v444, %v443
    %v465 = vpack.c.b16 %v446, %v445
    %v466 = vpack.c.b16 %v448, %v447
    %v467 = vpack.c.b16 %v450, %v449
    %v468 = vpack.c.b16 %v452, %v451
    %485 = vmatprep.subr.bf16.mxu0 0
    %486 = vmatpush1.bf16.msra.mxu0 %v460
    %487 = vmatprep.subr.bf16.mxu0 0
    %488 = vmatpush1.bf16.msra.mxu0 %v459
    %489 = vmatprep.subr.bf16.mxu0 0
    %490 = vmatpush1.bf16.msra.mxu0 %v458
    %491 = vmatprep.subr.bf16.mxu0 0
    %492 = vmatpush1.bf16.msra.mxu0 %v457
    %493 = vmatprep.subr.bf16.mxu0 0
    %494 = vmatpush1.bf16.msra.mxu0 %v456
    %495 = vmatprep.subr.bf16.mxu0 0
    %496 = vmatpush1.bf16.msra.mxu0 %v455
    %497 = vmatprep.subr.bf16.mxu0 0
    %498 = vmatpush1.bf16.msra.mxu0 %v454
    %499 = vmatprep.subr.bf16.mxu0 0
    %500 = vmatpush1.bf16.msra.mxu0 %v453
    %501 = vmatprep.subr.bf16.mxu0 0
    %502 = vmatpush2.bf16.msra.mxu0 %v468
    %503 = vmatprep.subr.bf16.mxu0 0
    %504 = vmatpush2.bf16.msra.mxu0 %v467
    %505 = vmatprep.subr.bf16.mxu0 0
    %506 = vmatpush2.bf16.msra.mxu0 %v466
    %507 = vmatprep.subr.bf16.mxu0 0
    %508 = vmatpush2.bf16.msra.mxu0 %v465
    %509 = vmatprep.subr.bf16.mxu0 0
    %510 = vmatpush2.bf16.msra.mxu0 %v464
    %511 = vmatprep.subr.bf16.mxu0 0
    %512 = vmatpush2.bf16.msra.mxu0 %v463
    %513 = vmatprep.subr.bf16.mxu0 0
    %514 = vmatpush2.bf16.msra.mxu0 %v462
    %515 = vmatprep.subr.bf16.mxu0 0
    %516 = vmatpush2.bf16.msra.mxu0 %v461
    %517 = vmatprep.mubr.bf16.mxu0 %v388
    %518 = vmatmul.mubr.bf16.gmra.mxu0 %v387
    %v519 = vpop.f32.mrf.mxu0
    %v520 = vadd.f32 %v106, %v519
    %v521 = vpop.f32.mrf.mxu0
    %v522 = vpop.f32.mrf.mxu0
    %v523 = vpop.f32.mrf.mxu0
    %524 = vdwg.mxu0
    %vm525 = vcmask 516096
    %526 = vst.msk [vmem:[#allocation5] sm:$0x1] %vm525, %v520
    %v527 = vld [vmem:[#allocation2 + $0x1] sm:$0x1]
    %528 = vmatprep.subr.bf16.mxu0 %v171
    %529 = vmatpush1.bf16.msra.mxu0 %v170
    %530 = vmatprep.subr.bf16.mxu0 %v169
    %531 = vmatpush1.bf16.msra.mxu0 %v168
    %532 = vmatprep.subr.bf16.mxu0 %v167
    %533 = vmatpush1.bf16.msra.mxu0 %v166
    %534 = vmatprep.subr.bf16.mxu0 %v165
    %535 = vmatpush1.bf16.msra.mxu0 %v164
    %536 = vmatprep.subr.bf16.mxu0 %v163
    %537 = vmatpush1.bf16.msra.mxu0 %v162
    %538 = vmatprep.subr.bf16.mxu0 %v161
    %539 = vmatpush1.bf16.msra.mxu0 %v160
    %540 = vmatprep.subr.bf16.mxu0 %v159
    %541 = vmatpush1.bf16.msra.mxu0 %v158
    %542 = vmatprep.subr.bf16.mxu0 %v157
    %543 = vmatpush1.bf16.msra.mxu0 %v156
    %544 = vmatprep.subr.bf16.mxu0 0
    %545 = vmatpush2.bf16.msra.mxu0 0
    %546 = vmatprep.subr.bf16.mxu0 0
    %547 = vmatpush2.bf16.msra.mxu0 0
    %548 = vmatprep.subr.bf16.mxu0 0
    %549 = vmatpush2.bf16.msra.mxu0 0
    %550 = vmatprep.subr.bf16.mxu0 0
    %551 = vmatpush2.bf16.msra.mxu0 0
    %552 = vmatprep.subr.bf16.mxu0 0
    %553 = vmatpush2.bf16.msra.mxu0 0
    %554 = vmatprep.subr.bf16.mxu0 0
    %555 = vmatpush2.bf16.msra.mxu0 0
    %556 = vmatprep.subr.bf16.mxu0 0
    %557 = vmatpush2.bf16.msra.mxu0 0
    %558 = vmatprep.subr.bf16.mxu0 0
    %559 = vmatpush2.bf16.msra.mxu0 0
    %560 = vmatprep.mubr.bf16.mxu0 0
    %561 = vmatmul.mubr.bf16.gmra.mxu0 %v527
    %v562 = vpop.f32.mrf.mxu0
    %v563 = vadd.f32 %v192, %v562
    %v564 = vpop.f32.mrf.mxu0
    %v565 = vadd.f32 %v196, %v564
    %v566 = vpop.f32.mrf.mxu0
    %v567 = vpop.f32.mrf.mxu0
    %568 = vdwg.mxu0
    %v569 = vmax.f32 %v563, 0.0
    %v570 = vmax.f32 %v565, 0.0
    %v571 = vpack.c.bf16 %v569, %v569
    %v572 = vpack.c.bf16 %v570, %v570
    %573 = vmatprep.subr.bf16.mxu0 0
    %574 = vmatpush1.bf16.msra.mxu0 %v283
    %575 = vmatprep.subr.bf16.mxu0 0
    %576 = vmatpush1.bf16.msra.mxu0 %v282
    %577 = vmatprep.subr.bf16.mxu0 0
    %578 = vmatpush1.bf16.msra.mxu0 %v281
    %579 = vmatprep.subr.bf16.mxu0 0
    %580 = vmatpush1.bf16.msra.mxu0 %v280
    %581 = vmatprep.subr.bf16.mxu0 0
    %582 = vmatpush1.bf16.msra.mxu0 %v279
    %583 = vmatprep.subr.bf16.mxu0 0
    %584 = vmatpush1.bf16.msra.mxu0 %v278
    %585 = vmatprep.subr.bf16.mxu0 0
    %586 = vmatpush1.bf16.msra.mxu0 %v277
    %587 = vmatprep.subr.bf16.mxu0 0
    %588 = vmatpush1.bf16.msra.mxu0 %v276
    %589 = vmatprep.subr.bf16.mxu0 0
    %590 = vmatpush2.bf16.msra.mxu0 0
    %591 = vmatprep.subr.bf16.mxu0 0
    %592 = vmatpush2.bf16.msra.mxu0 0
    %593 = vmatprep.subr.bf16.mxu0 0
    %594 = vmatpush2.bf16.msra.mxu0 0
    %595 = vmatprep.subr.bf16.mxu0 0
    %596 = vmatpush2.bf16.msra.mxu0 0
    %597 = vmatprep.subr.bf16.mxu0 0
    %598 = vmatpush2.bf16.msra.mxu0 0
    %599 = vmatprep.subr.bf16.mxu0 0
    %600 = vmatpush2.bf16.msra.mxu0 0
    %601 = vmatprep.subr.bf16.mxu0 0
    %602 = vmatpush2.bf16.msra.mxu0 0
    %603 = vmatprep.subr.bf16.mxu0 0
    %604 = vmatpush2.bf16.msra.mxu0 0
    %605 = vmatprep.mubr.bf16.mxu0 0
    %606 = vmatmul.mubr.bf16.gmra.mxu0 %v571
    %v607 = vpop.f32.mrf.mxu0
    %v608 = vadd.f32 0.0, %v607
    %v609 = vpop.f32.mrf.mxu0
    %v610 = vpop.f32.mrf.mxu0
    %v611 = vpop.f32.mrf.mxu0
    %612 = vdwg.mxu0
    %613 = vmatprep.subr.bf16.mxu0 0
    %614 = vmatpush1.bf16.msra.mxu0 %v283
    %615 = vmatprep.subr.bf16.mxu0 0
    %616 = vmatpush1.bf16.msra.mxu0 %v282
    %617 = vmatprep.subr.bf16.mxu0 0
    %618 = vmatpush1.bf16.msra.mxu0 %v281
    %619 = vmatprep.subr.bf16.mxu0 0
    %620 = vmatpush1.bf16.msra.mxu0 %v280
    %621 = vmatprep.subr.bf16.mxu0 0
    %622 = vmatpush1.bf16.msra.mxu0 %v279
    %623 = vmatprep.subr.bf16.mxu0 0
    %624 = vmatpush1.bf16.msra.mxu0 %v278
    %625 = vmatprep.subr.bf16.mxu0 0
    %626 = vmatpush1.bf16.msra.mxu0 %v277
    %627 = vmatprep.subr.bf16.mxu0 0
    %628 = vmatpush1.bf16.msra.mxu0 %v276
    %629 = vmatprep.subr.bf16.mxu0 0
    %630 = vmatpush2.bf16.msra.mxu0 0
    %631 = vmatprep.subr.bf16.mxu0 0
    %632 = vmatpush2.bf16.msra.mxu0 0
    %633 = vmatprep.subr.bf16.mxu0 0
    %634 = vmatpush2.bf16.msra.mxu0 0
    %635 = vmatprep.subr.bf16.mxu0 0
    %636 = vmatpush2.bf16.msra.mxu0 0
    %637 = vmatprep.subr.bf16.mxu0 0
    %638 = vmatpush2.bf16.msra.mxu0 0
    %639 = vmatprep.subr.bf16.mxu0 0
    %640 = vmatpush2.bf16.msra.mxu0 0
    %641 = vmatprep.subr.bf16.mxu0 0
    %642 = vmatpush2.bf16.msra.mxu0 0
    %643 = vmatprep.subr.bf16.mxu0 0
    %644 = vmatpush2.bf16.msra.mxu0 0
    %645 = vmatprep.mubr.bf16.mxu0 0
    %646 = vmatmul.mubr.bf16.gmra.mxu0 %v572
    %v647 = vpop.f32.mrf.mxu0
    %v648 = vadd.f32 0.0, %v647
    %v649 = vpop.f32.mrf.mxu0
    %v650 = vpop.f32.mrf.mxu0
    %v651 = vpop.f32.mrf.mxu0
    %652 = vdwg.mxu0
    %v653 = vadd.f32 %v608, %v376
    %v654 = vadd.f32 %v648, %v380
    %v655 = vmax.f32 %v653, 0.0
    %v656 = vmax.f32 %v654, 0.0
    %v657 = vpack.c.bf16 %v655, %v655
    %v658 = vpack.c.bf16 %v656, %v656
    %659 = vmatprep.subr.bf16.mxu0 0
    %660 = vmatpush1.bf16.msra.mxu0 %v460
    %661 = vmatprep.subr.bf16.mxu0 0
    %662 = vmatpush1.bf16.msra.mxu0 %v459
    %663 = vmatprep.subr.bf16.mxu0 0
    %664 = vmatpush1.bf16.msra.mxu0 %v458
    %665 = vmatprep.subr.bf16.mxu0 0
    %666 = vmatpush1.bf16.msra.mxu0 %v457
    %667 = vmatprep.subr.bf16.mxu0 0
    %668 = vmatpush1.bf16.msra.mxu0 %v456
    %669 = vmatprep.subr.bf16.mxu0 0
    %670 = vmatpush1.bf16.msra.mxu0 %v455
    %671 = vmatprep.subr.bf16.mxu0 0
    %672 = vmatpush1.bf16.msra.mxu0 %v454
    %673 = vmatprep.subr.bf16.mxu0 0
    %674 = vmatpush1.bf16.msra.mxu0 %v453
    %675 = vmatprep.subr.bf16.mxu0 0
    %676 = vmatpush2.bf16.msra.mxu0 %v468
    %677 = vmatprep.subr.bf16.mxu0 0
    %678 = vmatpush2.bf16.msra.mxu0 %v467
    %679 = vmatprep.subr.bf16.mxu0 0
    %680 = vmatpush2.bf16.msra.mxu0 %v466
    %681 = vmatprep.subr.bf16.mxu0 0
    %682 = vmatpush2.bf16.msra.mxu0 %v465
    %683 = vmatprep.subr.bf16.mxu0 0
    %684 = vmatpush2.bf16.msra.mxu0 %v464
    %685 = vmatprep.subr.bf16.mxu0 0
    %686 = vmatpush2.bf16.msra.mxu0 %v463
    %687 = vmatprep.subr.bf16.mxu0 0
    %688 = vmatpush2.bf16.msra.mxu0 %v462
    %689 = vmatprep.subr.bf16.mxu0 0
    %690 = vmatpush2.bf16.msra.mxu0 %v461
    %691 = vmatprep.mubr.bf16.mxu0 %v658
    %692 = vmatmul.mubr.bf16.gmra.mxu0 %v657
    %v693 = vpop.f32.mrf.mxu0
    %v694 = vadd.f32 %v106, %v693
    %v695 = vpop.f32.mrf.mxu0
    %v696 = vpop.f32.mrf.mxu0
    %v697 = vpop.f32.mrf.mxu0
    %698 = vdwg.mxu0
    %700 = vrot.lane.b32.xlu0 %v694, 64
    %v701 = vpop.permute.xlu0 %700
    %vm703 = vcmask 1040896
    %704 = vst.msk [vmem:[#allocation5] sm:$0x1] %vm703, %v701
    // Predicated region
    $region34: #{tpu_custom_call.1} parent=1 // pred_check
      _
    $region35: #{tpu_custom_call.1} parent=1 // pred_check_branch
      %706 = sbr.rel (0) target = $region37
    $region36: #{tpu_custom_call.1} parent=1 // pred_region
      %s708 = ssub.s32 16, 16
      %709 = vsyncadd [#allocation4], %s708
      %s711 = sshll.u32 [#allocation5], 4
      %s712 = int_to_ptr.vmem [resolvable:$true] %s711
      %714 = dma.vmem_to_hbm [thread:$0]  %s712, 16, %s7, [#allocation4]
    $region37: #{tpu_custom_call.1} parent=1 // pred_fallthru
      _
    // Predicated region
    $region38: #{tpu_custom_call.1} parent=1 // pred_check
      _
    $region39: #{tpu_custom_call.1} parent=1 // pred_check_branch
      %716 = sbr.rel (0) target = $region41
    $region40: #{tpu_custom_call.1} parent=1 // pred_region
      %717 = dma.done [#allocation4], 16
    $region41: #{tpu_custom_call.1} parent=1 // pred_fallthru
      _
    %718 = vsyncpa [#allocation3], 1
    %719 = vsyncpa [#allocation4], 1

</llo_original>
